<compile_context>
chip_gen: v5e
topology: v5e:2x2
jax: 0.10.0
libtpu: 0.0.40
codegen_flags: <defaults>
</compile_context>

<pallas_src>
import functools

import jax
import jax.numpy as jnp
from jax.experimental import pallas as pl
from jax.experimental.pallas import tpu as pltpu


_LANES = 128
_BLOCK_BYTES = 2 * 1024 * 1024   # per input block; x 2 inputs x 2 buffers ~= 8 MiB


def _l1_packed_kernel(pred_ref, target_ref, out_ref, *, C: int, RP: int):
    # pred_ref/target_ref: (TM, 128) lane-dense packed rows; each 128-lane row
    # holds RP = 128 // C whole logical rows.  out_ref: (TM, RP).
    diff = jnp.abs(pred_ref[...].astype(jnp.float32)
                   - target_ref[...].astype(jnp.float32))
    # Static unroll over the (small) number of logical rows per packed row:
    # contiguous lane slice + full f32 lane reduce per group (XLU), one narrow
    # column store each (negligible bytes vs. the input stream).
    for j in range(RP):
        s = jnp.sum(diff[:, j * C:(j + 1) * C], axis=-1, keepdims=True)
        out_ref[:, j:j + 1] = s.astype(out_ref.dtype)


def _l1_rowsum_kernel(pred_ref, target_ref, out_ref):
    # Fallback path: (TM, C) blocks (lane-padded when C % 128 != 0).
    diff = jnp.abs(pred_ref[...].astype(jnp.float32)
                   - target_ref[...].astype(jnp.float32))
    out_ref[...] = jnp.sum(diff, axis=-1, keepdims=True).astype(out_ref.dtype)


def _row_tile(num_rows: int, row_bytes: int) -> int:
    # Biggest row tile whose input block stays <= ~2 MiB (true, padded bytes).
    tm = max(8, ((_BLOCK_BYTES // max(row_bytes, 1)) // 8) * 8)
    if tm >= num_rows:
        return num_rows          # full dim: always a legal block extent
    return tm                    # multiple of 8 sublanes


def get_loss_forward(pred, target):
    """Pallas equivalent of get_loss.forward.

    pred:   anything reshapeable to (B, N, C) (same contract as the PyTorch code)
    target: (B, N, C)
    returns total_loss: (B, N) = sum over C of |pred - target| (dtype = target.dtype,
            accumulated in f32)
    """
    B, N, C = target.shape
    M = B * N
    out_dtype = target.dtype
    itemsize = jnp.dtype(target.dtype).itemsize

    if (128 % C == 0) and ((M * C) % _LANES == 0):
        # Fast path: pack 128 // C logical rows per 128-lane row (lane-dense).
        RP = _LANES // C
        R = (M * C) // _LANES
        pred2d = jnp.reshape(pred, (R, _LANES))
        target2d = jnp.reshape(target, (R, _LANES))
        TM = _row_tile(R, _LANES * itemsize)
        G = pl.cdiv(R, TM)
        kernel = functools.partial(_l1_packed_kernel, C=C, RP=RP)
        grid_spec = pltpu.PrefetchScalarGridSpec(
            num_scalar_prefetch=0,
            grid=(G,),
            in_specs=[
                pl.BlockSpec((TM, _LANES), lambda i: (i, 0)),
                pl.BlockSpec((TM, _LANES), lambda i: (i, 0)),
            ],
            out_specs=pl.BlockSpec((TM, RP), lambda i: (i, 0)),
        )
        out_shape = jax.ShapeDtypeStruct((R, RP), out_dtype)
    else:
        # TODO(synk): for C that does not divide 128 these (TM, C) blocks are
        # lane-padded (extra DMA bytes); an lcm(C, 128)-wide packed path would
        # recover that bandwidth.
        pred2d = jnp.reshape(pred, (M, C))
        target2d = jnp.reshape(target, (M, C))
        padded_c = ((C + _LANES - 1) // _LANES) * _LANES
        TM = _row_tile(M, padded_c * itemsize)
        G = pl.cdiv(M, TM)
        kernel = _l1_rowsum_kernel
        grid_spec = pltpu.PrefetchScalarGridSpec(
            num_scalar_prefetch=0,
            grid=(G,),
            in_specs=[
                pl.BlockSpec((TM, C), lambda i: (i, 0)),
                pl.BlockSpec((TM, C), lambda i: (i, 0)),
            ],
            out_specs=pl.BlockSpec((TM, 1), lambda i: (i, 0)),
        )
        out_shape = jax.ShapeDtypeStruct((M, 1), out_dtype)

    cost = pl.CostEstimate(
        flops=3 * M * C,                       # sub + abs + accumulate per element
        transcendentals=0,
        bytes_accessed=2 * M * C * itemsize + M * jnp.dtype(out_dtype).itemsize,
    )

    out = pl.pallas_call(
        kernel,
        out_shape=out_shape,
        grid_spec=grid_spec,
        cost_estimate=cost,
        compiler_params=pltpu.CompilerParams(
            # ~8 MiB actual usage; explicit limit keeps headroom obvious on every
            # generation (<= v7x's 64 MiB physical VMEM, > v5e's 16 MiB default).
            dimension_semantics=("parallel",),
            vmem_limit_bytes=32 * 1024 * 1024,
        ),
    )(pred2d, target2d)

    # Fast path: out[r, j] is logical row r * RP + j, so row-major flatten is
    # exactly the (B, N) order.  Fallback: out is (M, 1).
    return out.reshape(B, N)


if __name__ == "__main__":
    # Small shapes consistent with the module: B=2, N=8, C=32
    B, N, C = 2, 8, 32
    key = jax.random.PRNGKey(0)
    kp, kt = jax.random.split(key)
    # pred arrives flattened (the module's .reshape implies it may not already
    # be (B, N, C)); target is (B, N, C).
    pred = jax.random.normal(kp, (B, N * C), dtype=jnp.float32)
    target = jax.random.normal(kt, (B, N, C), dtype=jnp.float32)

    out = get_loss_forward(pred, target)
    out = jax.block_until_ready(out)

    # reference check (plain JAX)
    ref = jnp.sum(jnp.abs(pred.reshape(B, N, C) - target), axis=-1)
    assert out.shape == (B, N)
    assert jnp.allclose(out, ref, atol=1e-5, rtol=1e-5)
    print("KERNEL_OK")
</pallas_src>

<mosaic_0001>
module attributes {stable_mosaic.version = 11 : i64} {
  func.func @_l1_packed_kernel(%arg0: i32, %arg1: memref<4x128xf32, #tpu.memory_space<vmem>>, %arg2: memref<4x128xf32, #tpu.memory_space<vmem>>, %arg3: memref<4x4xf32, #tpu.memory_space<vmem>>) attributes {dimension_semantics = [#tpu.dimension_semantics<parallel>], iteration_bounds = array<i64: 1>, scalar_prefetch = 0 : i64, scratch_operands = 0 : i64, tpu.core_type = #tpu.core_type<tc>, window_params = [{transform_indices = @transform_0, window_bounds = array<i64: 4, 128>}, {transform_indices = @transform_1, window_bounds = array<i64: 4, 128>}, {transform_indices = @transform_2, window_bounds = array<i64: 4, 4>}]} {
    %c0 = arith.constant 0 : index
    %c0_0 = arith.constant 0 : index
    %0 = vector.load %arg1[%c0, %c0_0] : memref<4x128xf32, #tpu.memory_space<vmem>>, vector<4x128xf32>
    %c0_1 = arith.constant 0 : index
    %c0_2 = arith.constant 0 : index
    %1 = vector.load %arg2[%c0_1, %c0_2] : memref<4x128xf32, #tpu.memory_space<vmem>>, vector<4x128xf32>
    %2 = arith.subf %0, %1 : vector<4x128xf32>
    %3 = math.absf %2 : vector<4x128xf32>
    %4 = vector.extract_strided_slice %3 {offsets = [0, 0], sizes = [4, 32], strides = [1, 1]} : vector<4x128xf32> to vector<4x32xf32>
    %cst = arith.constant dense<0.000000e+00> : vector<4xf32>
    %5 = vector.multi_reduction <add>, %4, %cst [1] : vector<4x32xf32> to vector<4xf32>
    %6 = vector.shape_cast %5 : vector<4xf32> to vector<4x1xf32>
    %c0_3 = arith.constant 0 : index
    %c0_4 = arith.constant 0 : index
    %7 = vector.load %arg3[%c0_3, %c0_4] : memref<4x4xf32, #tpu.memory_space<vmem>>, vector<4x1xf32>
    tpu.vector_store %arg3[%c0_3, %c0_4], %6 {strides = array<i32>} : memref<4x4xf32, #tpu.memory_space<vmem>>, vector<4x1xf32>,
    %8 = vector.extract_strided_slice %3 {offsets = [0, 32], sizes = [4, 32], strides = [1, 1]} : vector<4x128xf32> to vector<4x32xf32>
    %cst_5 = arith.constant dense<0.000000e+00> : vector<4xf32>
    %9 = vector.multi_reduction <add>, %8, %cst_5 [1] : vector<4x32xf32> to vector<4xf32>
    %10 = vector.shape_cast %9 : vector<4xf32> to vector<4x1xf32>
    %c0_6 = arith.constant 0 : index
    %c1 = arith.constant 1 : index
    %11 = vector.load %arg3[%c0_6, %c1] : memref<4x4xf32, #tpu.memory_space<vmem>>, vector<4x1xf32>
    tpu.vector_store %arg3[%c0_6, %c1], %10 {strides = array<i32>} : memref<4x4xf32, #tpu.memory_space<vmem>>, vector<4x1xf32>,
    %12 = vector.extract_strided_slice %3 {offsets = [0, 64], sizes = [4, 32], strides = [1, 1]} : vector<4x128xf32> to vector<4x32xf32>
    %cst_7 = arith.constant dense<0.000000e+00> : vector<4xf32>
    %13 = vector.multi_reduction <add>, %12, %cst_7 [1] : vector<4x32xf32> to vector<4xf32>
    %14 = vector.shape_cast %13 : vector<4xf32> to vector<4x1xf32>
    %c0_8 = arith.constant 0 : index
    %c2 = arith.constant 2 : index
    %15 = vector.load %arg3[%c0_8, %c2] : memref<4x4xf32, #tpu.memory_space<vmem>>, vector<4x1xf32>
    tpu.vector_store %arg3[%c0_8, %c2], %14 {strides = array<i32>} : memref<4x4xf32, #tpu.memory_space<vmem>>, vector<4x1xf32>,
    %16 = vector.extract_strided_slice %3 {offsets = [0, 96], sizes = [4, 32], strides = [1, 1]} : vector<4x128xf32> to vector<4x32xf32>
    %cst_9 = arith.constant dense<0.000000e+00> : vector<4xf32>
    %17 = vector.multi_reduction <add>, %16, %cst_9 [1] : vector<4x32xf32> to vector<4xf32>
    %18 = vector.shape_cast %17 : vector<4xf32> to vector<4x1xf32>
    %c0_10 = arith.constant 0 : index
    %c3 = arith.constant 3 : index
    %19 = vector.load %arg3[%c0_10, %c3] : memref<4x4xf32, #tpu.memory_space<vmem>>, vector<4x1xf32>
    tpu.vector_store %arg3[%c0_10, %c3], %18 {strides = array<i32>} : memref<4x4xf32, #tpu.memory_space<vmem>>, vector<4x1xf32>,
    return
  }
  func.func @transform_0(%arg0: i32) -> (i32, i32) {
    %c0_i32 = arith.constant 0 : i32
    %c0_i32_0 = arith.constant 0 : i32
    return %arg0, %c0_i32 : i32, i32
  }
  func.func @transform_1(%arg0: i32) -> (i32, i32) {
    %c0_i32 = arith.constant 0 : i32
    %c0_i32_0 = arith.constant 0 : i32
    return %arg0, %c0_i32 : i32, i32
  }
  func.func @transform_2(%arg0: i32) -> (i32, i32) {
    %c0_i32 = arith.constant 0 : i32
    %c0_i32_0 = arith.constant 0 : i32
    return %arg0, %c0_i32 : i32, i32
  }
}

</mosaic_0001>

<llo_original>
// kernel: tpu_custom_call.1
$region0: #{tpu_custom_call.1}
  #allocation0 [shape = 'u32[]', space=smem, size = 0x4, offset = 0x4, fixed_abs, tag = 'smem constant byte address 0x4 - core index']
  #allocation1 [shape = 'u32[72,128]{1,0:T(1,128)}', space=vmem, size = 0x9000, scoped, tag = 'internal scratch']
  %s0 = inlined_call_operand.hbm [shape: f32[4,128], index: 0, kind: input, shape index: {}]
  %s1 = inlined_call_operand.hbm [shape: f32[4,128], index: 1, kind: input, shape index: {}]
  %s2 = inlined_call_operand.hbm [shape: f32[4,4], index: 2, kind: output, shape index: {}]
  %s3 = sld [smem:[#allocation0]]
  $region26: #{tpu_custom_call.1} parent=0
    _
  %s5 = ssub.s32 1, %s3
  %s6 = scalar_select 0, %s5, %s3
  $region1: #{tpu_custom_call.1} parent=0
    #allocation2 [shape = 'u8[2048]{0}', space=vmem, size = 0x800, scoped, tag = 'input window, operand 0, single buffered']
    #allocation3 [shape = 's32[1]{0}', space=sflag, size = 0x4, scoped, tag = 'scoped memory for tpu_custom_call.1']
    #allocation4 [shape = 's32[1]{0}', space=sflag, size = 0x4, scoped, tag = 'scoped memory for tpu_custom_call.1']
    #allocation5 [shape = 'u8[2048]{0}', space=vmem, size = 0x800, scoped, tag = 'input window, operand 1, single buffered']
    #allocation6 [shape = 's32[1]{0}', space=sflag, size = 0x4, scoped, tag = 'scoped memory for tpu_custom_call.1']
    #allocation7 [shape = 'u8[2048]{0}', space=vmem, size = 0x800, scoped, tag = 'output window, operand 0, single buffered']
    %7 = vsyncpa [#allocation3], 0
    %8 = vsyncpa [#allocation6], 0
    %9 = vsyncpa [#allocation4], 0
    // Predicated region
    $region2: #{tpu_custom_call.1} parent=1 // pred_check
      _
    $region3: #{tpu_custom_call.1} parent=1 // pred_check_branch
      %11 = sbr.rel (0) target = $region5
    $region4: #{tpu_custom_call.1} parent=1 // pred_region
      %13 = vsyncadd [#allocation3], 0
      %s15 = sshll.u32 %s0, 4
      %s16 = int_to_ptr.hbm [resolvable:$true] %s15
      %s17 = sshll.u32 [#allocation2], 4
      %s18 = int_to_ptr.vmem [resolvable:$true] %s17
      %20 = dma.hbm_to_vmem [thread:$0]  %s16, 64, %s18, [#allocation3]
    $region5: #{tpu_custom_call.1} parent=1 // pred_fallthru
      _
    // Predicated region
    $region6: #{tpu_custom_call.1} parent=1 // pred_check
      _
    $region7: #{tpu_custom_call.1} parent=1 // pred_check_branch
      %22 = sbr.rel (0) target = $region9
    $region8: #{tpu_custom_call.1} parent=1 // pred_region
      %24 = vsyncadd [#allocation6], 0
      %s26 = sshll.u32 %s1, 4
      %s27 = int_to_ptr.hbm [resolvable:$true] %s26
      %s28 = sshll.u32 [#allocation5], 4
      %s29 = int_to_ptr.vmem [resolvable:$true] %s28
      %31 = dma.hbm_to_vmem [thread:$0]  %s27, 64, %s29, [#allocation6]
    $region9: #{tpu_custom_call.1} parent=1 // pred_fallthru
      _
    // Predicated region
    $region10: #{tpu_custom_call.1} parent=1 // pred_check
      _
    $region11: #{tpu_custom_call.1} parent=1 // pred_check_branch
      %33 = sbr.rel (0) target = $region13
    $region12: #{tpu_custom_call.1} parent=1 // pred_region
      %35 = dma.done [#allocation3], 64
    $region13: #{tpu_custom_call.1} parent=1 // pred_fallthru
      _
    // Predicated region
    $region14: #{tpu_custom_call.1} parent=1 // pred_check
      _
    $region15: #{tpu_custom_call.1} parent=1 // pred_check_branch
      %37 = sbr.rel (0) target = $region17
    $region16: #{tpu_custom_call.1} parent=1 // pred_region
      %39 = dma.done [#allocation6], 64
    $region17: #{tpu_custom_call.1} parent=1 // pred_fallthru
      _
    %v40 = vld [vmem:[#allocation2] sm:$0xf]
    %v41 = vld [vmem:[#allocation5] sm:$0xf]
    %v42 = vsub.f32 %v40, %v41
    %v43 = vand.u32 2147483647, %v42
    %vm44 = vcmask 257024
    %v45 = vsel %vm44, %v43, 0.0
    %46 = vadd.xlane.f32.xlu0 %v45
    %v47 = vpop.xlane.xlu0 %46
    %vm48 = vcmask 3072
    %49 = vst.msk [vmem:[#allocation7] sm:$0xf] %vm48, %v47
    %51 = vrot.lane.b32.xlu0 %v43, 96
    %v52 = vpop.permute.xlu0 %51
    %v54 = vsel %vm44, %v52, 0.0
    %55 = vadd.xlane.f32.xlu0 %v54
    %v56 = vpop.xlane.xlu0 %55
    %vm57 = vcmask 11272
    %58 = vst.msk [vmem:[#allocation7] sm:$0xf] %vm57, %v56
    %59 = vrot.lane.b32.xlu0 %v43, 64
    %v60 = vpop.permute.xlu0 %59
    %v62 = vsel %vm44, %v60, 0.0
    %63 = vadd.xlane.f32.xlu0 %v62
    %v64 = vpop.xlane.xlu0 %63
    %vm65 = vcmask 19472
    %66 = vst.msk [vmem:[#allocation7] sm:$0xf] %vm65, %v64
    %67 = vrot.lane.b32.xlu0 %v43, 32
    %v68 = vpop.permute.xlu0 %67
    %v70 = vsel %vm44, %v68, 0.0
    %71 = vadd.xlane.f32.xlu0 %v70
    %v72 = vpop.xlane.xlu0 %71
    %vm73 = vcmask 27672
    %74 = vst.msk [vmem:[#allocation7] sm:$0xf] %vm73, %v72
    // Predicated region
    $region18: #{tpu_custom_call.1} parent=1 // pred_check
      _
    $region19: #{tpu_custom_call.1} parent=1 // pred_check_branch
      %76 = sbr.rel (0) target = $region21
    $region20: #{tpu_custom_call.1} parent=1 // pred_region
      %78 = vsyncadd [#allocation4], 0
      %s80 = sshll.u32 [#allocation7], 4
      %s81 = int_to_ptr.vmem [resolvable:$true] %s80
      %s82 = sshll.u32 %s2, 4
      %s83 = int_to_ptr.hbm [resolvable:$true] %s82
      %85 = dma.vmem_to_hbm [thread:$0]  %s81, 64, %s83, [#allocation4]
    $region21: #{tpu_custom_call.1} parent=1 // pred_fallthru
      _
    // Predicated region
    $region22: #{tpu_custom_call.1} parent=1 // pred_check
      _
    $region23: #{tpu_custom_call.1} parent=1 // pred_check_branch
      %87 = sbr.rel (0) target = $region25
    $region24: #{tpu_custom_call.1} parent=1 // pred_region
      %89 = dma.done [#allocation4], 64
    $region25: #{tpu_custom_call.1} parent=1 // pred_fallthru
      _
    %90 = vsyncpa [#allocation3], 1
    %91 = vsyncpa [#allocation6], 1
    %92 = vsyncpa [#allocation4], 1

</llo_original>
